<compile_context>
chip_gen: v6e
topology: v6e:2x2x1
jax: 0.10.0
libtpu: 0.0.40
codegen_flags: <defaults>
</compile_context>

<pallas_src>
import jax
import jax.numpy as jnp
from jax.experimental import pallas as pl
from jax.experimental.pallas import tpu as pltpu

_LANES = 128
_ACC_ROWS = 32            # accumulator height: 4 f32 vregs -> 4 independent add chains
_MAX_BLOCK_ROWS = 8192    # (8192,128) f32 = 4 MiB per input block
_MIN_PALLAS_ELEMENTS = 65536
_VMEM_LIMIT_BYTES = 48 << 20   # covers 16 MiB double-buffered blocks + temporaries


def _cdiv(a, b):
    return -(-a // b)


def _round_up(a, b):
    return _cdiv(a, b) * b


def _make_l1_kernel(block_rows, valid_last_rows):
    """Build the per-tile kernel. `block_rows` / `valid_last_rows` are trace-time ints."""
    needs_mask = valid_last_rows < block_rows

    def kernel(pred_ref, tgt_ref, acc_ref):
        t = pl.program_id(0)

        @pl.when(t == 0)
        def _zero():
            acc_ref[...] = jnp.zeros_like(acc_ref)

        # Upcast in-register (inputs may be bf16); the kernel is HBM-bandwidth bound,
        # and bf16 inputs keep their halved HBM footprint (no wrapper upcast).
        diff = jnp.abs(pred_ref[...].astype(jnp.float32)
                       - tgt_ref[...].astype(jnp.float32))

        def accumulate(d):
            # Collapse block rows onto the (32,128) accumulator with pure VPU adds
            # (4 independent chains); the expensive cross-lane/sublane scalar reduce
            # happens exactly once, outside the kernel, on the tiny partials array.
            acc_ref[...] += d.reshape(
                block_rows // _ACC_ROWS, _ACC_ROWS, _LANES).sum(axis=0)

        if needs_mask:
            is_last = t == pl.num_programs(0) - 1

            @pl.when(jnp.logical_not(is_last))
            def _full():
                accumulate(diff)

            @pl.when(is_last)
            def _masked():
                # Rows past the array end hold garbage (partial edge block): mask
                # them with the trace-time-constant valid row count.
                row_ids = jax.lax.broadcasted_iota(
                    jnp.int32, (block_rows, _LANES), 0)
                accumulate(jnp.where(row_ids < valid_last_rows, diff, 0.0))
        else:
            accumulate(diff)

    return kernel


def reg_loss(points_pred, points_target, *, force_pallas=False,
             max_block_rows=_MAX_BLOCK_ROWS):
    """Pallas equivalent of RegLoss.forward: mean(|pred - target|).

    Args:
      points_pred:    (N, num_correspondence, 3) array (f32 or bf16).
      points_target:  same shape as points_pred.
      force_pallas:   run the Pallas kernel even for tiny inputs (testing).
      max_block_rows: cap on rows per block (testing / VMEM tuning).
    Returns:
      scalar float32 loss.
    """
    assert points_pred.shape == points_target.shape
    total_count = 1
    for d in points_pred.shape:
        total_count *= d
    inv_count = 1.0 / float(total_count)   # baked at trace time; no in-kernel divide

    def _xla_path():
        return jnp.mean(jnp.abs(points_pred.astype(jnp.float32)
                                - points_target.astype(jnp.float32)))

    rows = total_count // _LANES
    if rows == 0 or (total_count < _MIN_PALLAS_ELEMENTS and not force_pallas):
        # Launch + per-step overhead dwarfs the work at this size; let XLA fuse it.
        return _xla_path()

    rem = total_count - rows * _LANES
    flat_pred = points_pred.reshape(-1)
    flat_tgt = points_target.reshape(-1)

    tail_sum = jnp.float32(0.0)
    if rem:
        # Sub-128-element tail: reduced by a fused XLA expression (trivial cost).
        tail_sum = jnp.sum(jnp.abs(
            flat_pred[rows * _LANES:].astype(jnp.float32)
            - flat_tgt[rows * _LANES:].astype(jnp.float32)))
        # NOTE: this prefix slice only happens when total_count % 128 != 0; the
        # common aligned case keeps the reshape a free bitcast (no HBM copy).
        flat_pred = flat_pred[:rows * _LANES]
        flat_tgt = flat_tgt[:rows * _LANES]

    pred2d = flat_pred.reshape(rows, _LANES)
    tgt2d = flat_tgt.reshape(rows, _LANES)

    # Block sizing: multiple of the (32,128) accumulator tile; last block may be
    # partial (masked in-kernel).  32-row alignment also satisfies bf16 packing.
    mbr = _round_up(max(int(max_block_rows), _ACC_ROWS), _ACC_ROWS)
    block_rows = min(mbr, _round_up(rows, _ACC_ROWS))
    num_tiles = _cdiv(rows, block_rows)
    valid_last = rows - (num_tiles - 1) * block_rows

    kernel = _make_l1_kernel(block_rows, valid_last)

    in_spec = pl.BlockSpec((block_rows, _LANES), lambda t: (t, 0))
    # Output block index is constant across the reduction axis -> resident accumulator.
    out_spec = pl.BlockSpec((_ACC_ROWS, _LANES), lambda t: (0, 0))

    bulk = rows * _LANES
    itemsize = jnp.dtype(points_pred.dtype).itemsize
    cost = pl.CostEstimate(
        flops=3 * bulk,
        transcendentals=0,
        bytes_accessed=2 * bulk * itemsize + _ACC_ROWS * _LANES * 4,
    )

    partials = pl.pallas_call(
        kernel,
        out_shape=jax.ShapeDtypeStruct((_ACC_ROWS, _LANES), jnp.float32),
        grid_spec=pl.GridSpec(
            grid=(num_tiles,),
            in_specs=[in_spec, in_spec],
            out_specs=out_spec,
        ),
        compiler_params=pltpu.CompilerParams(
            dimension_semantics=("arbitrary",),
            vmem_limit_bytes=_VMEM_LIMIT_BYTES,
        ),
        cost_estimate=cost,
    )(pred2d, tgt2d)

    # Single cross-lane/sublane collapse + scale by precomputed reciprocal.
    return (jnp.sum(partials) + tail_sum) * jnp.float32(inv_count)


if __name__ == "__main__":
    key = jax.random.PRNGKey(0)
    k1, k2, k3, k4, k5, k6, k7, k8 = jax.random.split(key, 8)

    def ref_loss(a, b):
        return jnp.mean(jnp.abs(a.astype(jnp.float32) - b.astype(jnp.float32)))

    # 1) Small shape matching the module's (N, num_correspondence, 3) layout;
    #    forces the kernel path and exercises the partial-last-block row mask.
    pred_s = jax.random.normal(k1, (2, 64, 3), dtype=jnp.float32)
    tgt_s = jax.random.normal(k2, (2, 64, 3), dtype=jnp.float32)
    out_s = jax.block_until_ready(reg_loss(pred_s, tgt_s, force_pallas=True))
    assert jnp.allclose(out_s, ref_loss(pred_s, tgt_s), atol=1e-6, rtol=1e-6), \
        (out_s, ref_loss(pred_s, tgt_s))

    # 2) Element count NOT divisible by 128: Pallas bulk + tiny XLA tail.
    pred_r = jax.random.normal(k3, (3, 43, 3), dtype=jnp.float32)
    tgt_r = jax.random.normal(k4, (3, 43, 3), dtype=jnp.float32)
    out_r = jax.block_until_ready(reg_loss(pred_r, tgt_r, force_pallas=True))
    assert jnp.allclose(out_r, ref_loss(pred_r, tgt_r), atol=1e-6, rtol=1e-6), \
        (out_r, ref_loss(pred_r, tgt_r))

    # 3) Multi-tile reduction (small max_block_rows so the grid has several
    #    pipelined steps) -- exercises the resident accumulator path.
    pred_m = jax.random.normal(k5, (8, 4096, 3), dtype=jnp.float32)
    tgt_m = jax.random.normal(k6, (8, 4096, 3), dtype=jnp.float32)
    out_m = jax.block_until_ready(reg_loss(pred_m, tgt_m, max_block_rows=256))
    assert jnp.allclose(out_m, ref_loss(pred_m, tgt_m), atol=1e-5, rtol=1e-5), \
        (out_m, ref_loss(pred_m, tgt_m))

    # 4) bf16 inputs (sub-32-bit packing; 32-row blocks keep whole packed tiles).
    pred_h = jax.random.normal(k7, (4, 1024, 3), dtype=jnp.bfloat16)
    tgt_h = jax.random.normal(k8, (4, 1024, 3), dtype=jnp.bfloat16)
    out_h = jax.block_until_ready(
        reg_loss(pred_h, tgt_h, force_pallas=True, max_block_rows=32))
    assert jnp.allclose(out_h, ref_loss(pred_h, tgt_h), atol=1e-5, rtol=1e-5), \
        (out_h, ref_loss(pred_h, tgt_h))

    print("KERNEL_OK")
</pallas_src>

<mosaic_0001>
module attributes {stable_mosaic.version = 11 : i64} {
  func.func @kernel(%arg0: i32, %arg1: memref<32x128xf32, #tpu.memory_space<vmem>>, %arg2: memref<32x128xf32, #tpu.memory_space<vmem>>, %arg3: memref<32x128xf32, #tpu.memory_space<vmem>>) attributes {dimension_semantics = [#tpu.dimension_semantics<arbitrary>], iteration_bounds = array<i64: 1>, scalar_prefetch = 0 : i64, scratch_operands = 0 : i64, tpu.core_type = #tpu.core_type<tc>, window_params = [{transform_indices = @transform_0, window_bounds = array<i64: 32, 128>}, {transform_indices = @transform_1, window_bounds = array<i64: 32, 128>}, {pipeline_mode = #tpu.pipeline_mode<synchronous>, transform_indices = @transform_2, window_bounds = array<i64: 32, 128>}]} {
    %c0_i32 = arith.constant 0 : i32
    %0 = arith.cmpi eq, %arg0, %c0_i32 : i32
    %1 = arith.extui %0 : i1 to i32
    %c0_i32_0 = arith.constant 0 : i32
    %2 = arith.cmpi ne, %1, %c0_i32_0 : i32
    scf.if %2 {
      %cst = arith.constant 0.000000e+00 : f32
      %13 = vector.broadcast %cst : f32 to vector<32x128xf32>
      %c0_7 = arith.constant 0 : index
      %c0_8 = arith.constant 0 : index
      %14 = vector.load %arg3[%c0_7, %c0_8] : memref<32x128xf32, #tpu.memory_space<vmem>>, vector<32x128xf32>
      tpu.vector_store %arg3[%c0_7, %c0_8], %13 {strides = array<i32>} : memref<32x128xf32, #tpu.memory_space<vmem>>, vector<32x128xf32>,
    } else {
    }
    %c0 = arith.constant 0 : index
    %c0_1 = arith.constant 0 : index
    %3 = vector.load %arg1[%c0, %c0_1] : memref<32x128xf32, #tpu.memory_space<vmem>>, vector<32x128xf32>
    %c0_2 = arith.constant 0 : index
    %c0_3 = arith.constant 0 : index
    %4 = vector.load %arg2[%c0_2, %c0_3] : memref<32x128xf32, #tpu.memory_space<vmem>>, vector<32x128xf32>
    %5 = arith.subf %3, %4 : vector<32x128xf32>
    %6 = math.absf %5 : vector<32x128xf32>
    %c0_i32_4 = arith.constant 0 : i32
    %7 = arith.cmpi eq, %arg0, %c0_i32_4 : i32
    %true = arith.constant true
    %8 = arith.xori %7, %true : i1
    %9 = arith.extui %8 : i1 to i32
    %c0_i32_5 = arith.constant 0 : i32
    %10 = arith.cmpi ne, %9, %c0_i32_5 : i32
    scf.if %10 {
      %c0_7 = arith.constant 0 : index
      %c0_8 = arith.constant 0 : index
      %13 = vector.load %arg3[%c0_7, %c0_8] : memref<32x128xf32, #tpu.memory_space<vmem>>, vector<32x128xf32>
      %14 = vector.shape_cast %6 : vector<32x128xf32> to vector<1x32x128xf32>
      %cst = arith.constant dense<0.000000e+00> : vector<32x128xf32>
      %15 = vector.multi_reduction <add>, %14, %cst [0] : vector<1x32x128xf32> to vector<32x128xf32>
      %16 = arith.addf %13, %15 : vector<32x128xf32>
      %c0_9 = arith.constant 0 : index
      %c0_10 = arith.constant 0 : index
      %17 = vector.load %arg3[%c0_9, %c0_10] : memref<32x128xf32, #tpu.memory_space<vmem>>, vector<32x128xf32>
      tpu.vector_store %arg3[%c0_9, %c0_10], %16 {strides = array<i32>} : memref<32x128xf32, #tpu.memory_space<vmem>>, vector<32x128xf32>,
    } else {
    }
    %11 = arith.extui %7 : i1 to i32
    %c0_i32_6 = arith.constant 0 : i32
    %12 = arith.cmpi ne, %11, %c0_i32_6 : i32
    scf.if %12 {
      %13 = tpu.iota {dimensions = array<i32: 0>} : vector<32x128xi32>
      %c3_i32 = arith.constant 3 : i32
      %14 = vector.broadcast %c3_i32 : i32 to vector<32x128xi32>
      %15 = arith.cmpi slt, %13, %14 : vector<32x128xi32>
      %cst = arith.constant 0.000000e+00 : f32
      %16 = vector.broadcast %cst : f32 to vector<32x128xf32>
      %17 = arith.select %15, %6, %16 : vector<32x128xi1>, vector<32x128xf32>
      %c0_7 = arith.constant 0 : index
      %c0_8 = arith.constant 0 : index
      %18 = vector.load %arg3[%c0_7, %c0_8] : memref<32x128xf32, #tpu.memory_space<vmem>>, vector<32x128xf32>
      %19 = vector.shape_cast %17 : vector<32x128xf32> to vector<1x32x128xf32>
      %cst_9 = arith.constant dense<0.000000e+00> : vector<32x128xf32>
      %20 = vector.multi_reduction <add>, %19, %cst_9 [0] : vector<1x32x128xf32> to vector<32x128xf32>
      %21 = arith.addf %18, %20 : vector<32x128xf32>
      %c0_10 = arith.constant 0 : index
      %c0_11 = arith.constant 0 : index
      %22 = vector.load %arg3[%c0_10, %c0_11] : memref<32x128xf32, #tpu.memory_space<vmem>>, vector<32x128xf32>
      tpu.vector_store %arg3[%c0_10, %c0_11], %21 {strides = array<i32>} : memref<32x128xf32, #tpu.memory_space<vmem>>, vector<32x128xf32>,
    } else {
    }
    return
  }
  func.func @transform_0(%arg0: i32) -> (i32, i32) {
    %c0_i32 = arith.constant 0 : i32
    %c0_i32_0 = arith.constant 0 : i32
    return %arg0, %c0_i32 : i32, i32
  }
  func.func @transform_1(%arg0: i32) -> (i32, i32) {
    %c0_i32 = arith.constant 0 : i32
    %c0_i32_0 = arith.constant 0 : i32
    return %arg0, %c0_i32 : i32, i32
  }
  func.func @transform_2(%arg0: i32) -> (i32, i32) {
    %c0_i32 = arith.constant 0 : i32
    %c0_i32_0 = arith.constant 0 : i32
    %c0_i32_1 = arith.constant 0 : i32
    return %c0_i32, %c0_i32_0 : i32, i32
  }
}

</mosaic_0001>

<llo_original>
// kernel: tpu_custom_call.1
$region0: #{tpu_custom_call.1}
  #allocation0 [shape = 'u32[]', space=smem, size = 0x4, offset = 0x4, fixed_abs, tag = 'smem constant byte address 0x4 - core index']
  #allocation1 [shape = 'u32[144,128]{1,0:T(1,128)}', space=vmem, size = 0x12000, scoped, tag = 'internal scratch']
  %s0 = inlined_call_operand.hbm [shape: f32[3,128], index: 0, kind: input, shape index: {}]
  %s1 = inlined_call_operand.hbm [shape: f32[3,128], index: 1, kind: input, shape index: {}]
  %s2 = inlined_call_operand.hbm [shape: f32[32,128], index: 2, kind: output, shape index: {}]
  %s3 = sld [smem:[#allocation0]]
  $region38: #{tpu_custom_call.1} parent=0
    _
  %s5 = ssub.s32 1, %s3
  %s6 = scalar_select 0, %s5, %s3
  $region1: #{tpu_custom_call.1} parent=0
    #allocation2 [shape = 'u8[16384]{0}', space=vmem, size = 0x4000, scoped, tag = 'input window, operand 0, single buffered']
    #allocation3 [shape = 's32[1]{0}', space=sflag, size = 0x4, scoped, tag = 'scoped memory for tpu_custom_call.1']
    #allocation4 [shape = 's32[1]{0}', space=sflag, size = 0x4, scoped, tag = 'scoped memory for tpu_custom_call.1']
    #allocation5 [shape = 'u8[16384]{0}', space=vmem, size = 0x4000, scoped, tag = 'input window, operand 1, single buffered']
    #allocation6 [shape = 's32[1]{0}', space=sflag, size = 0x4, scoped, tag = 'scoped memory for tpu_custom_call.1']
    #allocation7 [shape = 'u8[16384]{0}', space=vmem, size = 0x4000, scoped, tag = 'output window, operand 0, single buffered']
    %7 = vsyncpa [#allocation3], 0
    %8 = vsyncpa [#allocation6], 0
    %9 = vsyncpa [#allocation4], 0
    // Predicated region
    $region2: #{tpu_custom_call.1} parent=1 // pred_check
      _
    $region3: #{tpu_custom_call.1} parent=1 // pred_check_branch
      %11 = sbr.rel (0) target = $region5
    $region4: #{tpu_custom_call.1} parent=1 // pred_region
      %s13 = ssub.s32 512, 64
      %14 = vsyncadd [#allocation3], %s13
      %s15 = sshll.u32 [#allocation2], 4
      %s16 = int_to_ptr.vmem [resolvable:$true] %s15
      %21 = dma.hbm_to_vmem [thread:$0]  %s0, 64, %s16, [#allocation3], 64, 64, 4
    $region5: #{tpu_custom_call.1} parent=1 // pred_fallthru
      _
    // Predicated region
    $region6: #{tpu_custom_call.1} parent=1 // pred_check
      _
    $region7: #{tpu_custom_call.1} parent=1 // pred_check_branch
      %23 = sbr.rel (0) target = $region9
    $region8: #{tpu_custom_call.1} parent=1 // pred_region
      %s25 = ssub.s32 512, 64
      %26 = vsyncadd [#allocation6], %s25
      %s27 = sshll.u32 [#allocation5], 4
      %s28 = int_to_ptr.vmem [resolvable:$true] %s27
      %33 = dma.hbm_to_vmem [thread:$0]  %s1, 64, %s28, [#allocation6], 64, 64, 4
    $region9: #{tpu_custom_call.1} parent=1 // pred_fallthru
      _
    // Predicated region
    $region10: #{tpu_custom_call.1} parent=1 // pred_check
      _
    $region11: #{tpu_custom_call.1} parent=1 // pred_check_branch
      %35 = sbr.rel (0) target = $region13
    $region12: #{tpu_custom_call.1} parent=1 // pred_region
      %36 = dma.done [#allocation3], 512
    $region13: #{tpu_custom_call.1} parent=1 // pred_fallthru
      _
    // Predicated region
    $region14: #{tpu_custom_call.1} parent=1 // pred_check
      _
    $region15: #{tpu_custom_call.1} parent=1 // pred_check_branch
      %38 = sbr.rel (0) target = $region17
    $region16: #{tpu_custom_call.1} parent=1 // pred_region
      %39 = dma.done [#allocation6], 512
    $region17: #{tpu_custom_call.1} parent=1 // pred_fallthru
      _
    %p40 = scmp.eq.s32.totalorder 0, 0
    // Predicated region
    $region18: #{tpu_custom_call.1} parent=1 // pred_check
      %p41 = pneg %p40
    $region19: #{tpu_custom_call.1} parent=1 // pred_check_branch
      %43 = sbr.rel (%p41) target = $region21
    $region20: #{tpu_custom_call.1} parent=1 // pred_region
      %44 = vst [vmem:[#allocation7] sm:$0xff] 0.0
      %45 = vst [vmem:[#allocation7 + $0x8] sm:$0xff] 0.0
      %46 = vst [vmem:[#allocation7 + $0x10] sm:$0xff] 0.0
      %47 = vst [vmem:[#allocation7 + $0x18] sm:$0xff] 0.0
    $region21: #{tpu_custom_call.1} parent=1 // pred_fallthru
      _
    %v48 = vld [vmem:[#allocation2] sm:$0xff]
    %v49 = vld [vmem:[#allocation2 + $0x8] sm:$0xff]
    %v50 = vld [vmem:[#allocation2 + $0x10] sm:$0xff]
    %v51 = vld [vmem:[#allocation2 + $0x18] sm:$0xff]
    %v52 = vld [vmem:[#allocation5] sm:$0xff]
    %v53 = vld [vmem:[#allocation5 + $0x8] sm:$0xff]
    %v54 = vld [vmem:[#allocation5 + $0x10] sm:$0xff]
    %v55 = vld [vmem:[#allocation5 + $0x18] sm:$0xff]
    %v56 = vsub.f32 %v48, %v52
    %v57 = vsub.f32 %v49, %v53
    %v58 = vsub.f32 %v50, %v54
    %v59 = vsub.f32 %v51, %v55
    %v60 = vand.u32 2147483647, %v56
    %v61 = vand.u32 2147483647, %v57
    %v62 = vand.u32 2147483647, %v58
    %v63 = vand.u32 2147483647, %v59
    %p64 = scmp.ne.s32.totalorder 0, 0
    // Predicated region
    $region22: #{tpu_custom_call.1} parent=1 // pred_check
      %p65 = pneg %p64
    $region23: #{tpu_custom_call.1} parent=1 // pred_check_branch
      %67 = sbr.rel (%p65) target = $region25
    $region24: #{tpu_custom_call.1} parent=1 // pred_region
      %v68 = vld [vmem:[#allocation7] sm:$0xff]
      %v69 = vld [vmem:[#allocation7 + $0x8] sm:$0xff]
      %v70 = vld [vmem:[#allocation7 + $0x10] sm:$0xff]
      %v71 = vld [vmem:[#allocation7 + $0x18] sm:$0xff]
      %v72 = vadd.f32 %v60, 0.0
      %v73 = vadd.f32 %v61, 0.0
      %v74 = vadd.f32 %v62, 0.0
      %v75 = vadd.f32 %v63, 0.0
      %v76 = vadd.f32 %v68, %v72
      %v77 = vadd.f32 %v69, %v73
      %v78 = vadd.f32 %v70, %v74
      %v79 = vadd.f32 %v71, %v75
      %80 = vst [vmem:[#allocation7] sm:$0xff] %v76
      %81 = vst [vmem:[#allocation7 + $0x8] sm:$0xff] %v77
      %82 = vst [vmem:[#allocation7 + $0x10] sm:$0xff] %v78
      %83 = vst [vmem:[#allocation7 + $0x18] sm:$0xff] %v79
    $region25: #{tpu_custom_call.1} parent=1 // pred_fallthru
      _
    // Predicated region
    $region26: #{tpu_custom_call.1} parent=1 // pred_check
      %p84 = pneg %p40
    $region27: #{tpu_custom_call.1} parent=1 // pred_check_branch
      %86 = sbr.rel (%p84) target = $region29
    $region28: #{tpu_custom_call.1} parent=1 // pred_region
      %v87 = vlaneseq
      %v88 = vshrl.u32 %v87, 7
      %v89 = vadd.s32 %v88, 8
      %v90 = vadd.s32 %v88, 16
      %v91 = vadd.s32 %v88, 24
      %vm92 = vcmp.lt.s32.totalorder %v88, 3
      %vm93 = vcmp.lt.s32.totalorder %v89, 3
      %vm94 = vcmp.lt.s32.totalorder %v90, 3
      %vm95 = vcmp.lt.s32.totalorder %v91, 3
      %v96 = vsel %vm92, %v60, 0.0
      %v97 = vsel %vm93, %v61, 0.0
      %v98 = vsel %vm94, %v62, 0.0
      %v99 = vsel %vm95, %v63, 0.0
      %v100 = vld [vmem:[#allocation7] sm:$0xff]
      %v101 = vld [vmem:[#allocation7 + $0x8] sm:$0xff]
      %v102 = vld [vmem:[#allocation7 + $0x10] sm:$0xff]
      %v103 = vld [vmem:[#allocation7 + $0x18] sm:$0xff]
      %v104 = vadd.f32 %v96, 0.0
      %v105 = vadd.f32 %v97, 0.0
      %v106 = vadd.f32 %v98, 0.0
      %v107 = vadd.f32 %v99, 0.0
      %v108 = vadd.f32 %v100, %v104
      %v109 = vadd.f32 %v101, %v105
      %v110 = vadd.f32 %v102, %v106
      %v111 = vadd.f32 %v103, %v107
      %112 = vst [vmem:[#allocation7] sm:$0xff] %v108
      %113 = vst [vmem:[#allocation7 + $0x8] sm:$0xff] %v109
      %114 = vst [vmem:[#allocation7 + $0x10] sm:$0xff] %v110
      %115 = vst [vmem:[#allocation7 + $0x18] sm:$0xff] %v111
    $region29: #{tpu_custom_call.1} parent=1 // pred_fallthru
      _
    // Predicated region
    $region30: #{tpu_custom_call.1} parent=1 // pred_check
      _
    $region31: #{tpu_custom_call.1} parent=1 // pred_check_branch
      %117 = sbr.rel (0) target = $region33
    $region32: #{tpu_custom_call.1} parent=1 // pred_region
      %s119 = ssub.s32 512, 512
      %120 = vsyncadd [#allocation4], %s119
      %s121 = sshll.u32 [#allocation7], 4
      %s122 = int_to_ptr.vmem [resolvable:$true] %s121
      %127 = dma.vmem_to_hbm [thread:$0]  %s122, 512, %s2, [#allocation4], 128, 128, 8
    $region33: #{tpu_custom_call.1} parent=1 // pred_fallthru
      _
    // Predicated region
    $region34: #{tpu_custom_call.1} parent=1 // pred_check
      _
    $region35: #{tpu_custom_call.1} parent=1 // pred_check_branch
      %129 = sbr.rel (0) target = $region37
    $region36: #{tpu_custom_call.1} parent=1 // pred_region
      %130 = dma.done [#allocation4], 512
    $region37: #{tpu_custom_call.1} parent=1 // pred_fallthru
      _
    %131 = vsyncpa [#allocation3], 1
    %132 = vsyncpa [#allocation6], 1
    %133 = vsyncpa [#allocation4], 1

</llo_original>
